<compile_context>
chip_gen: v7x
topology: tpu7x:2x2x1
jax: 0.10.0
libtpu: 0.0.40
codegen_flags: <defaults>
</compile_context>

<pallas_src>
import jax
import jax.numpy as jnp
from jax.experimental import pallas as pl
from jax.experimental.pallas import tpu as pltpu

_LANES = 128            # one full vreg lane width: unmasked wide vst, contiguous DMA
_SUBLANE_MULT = 32      # respects f32 (8,128) / bf16 (16,128) / fp8 (32,128) tiling
_MIN_GRID_STEPS = 2     # let the "parallel" axis shard across both TCs on v7x


def _swish_kernel(x_ref, o_ref):
    # Compute in f32: required on v5e (no bf16 VPU/EUP). On v6e/v7x the upcast
    # and the EUP sigmoid are fully hidden under the HBM DMA (op is mem-bound),
    # so keeping the f32 path everywhere is free and always supported.
    xf = x_ref[...].astype(jnp.float32)
    o_ref[...] = (xf * jax.nn.sigmoid(xf)).astype(o_ref.dtype)


def _swish_jnp(v):
    vf = v.astype(jnp.float32)
    return (vf * jax.nn.sigmoid(vf)).astype(v.dtype)


def _round_up(a: int, b: int) -> int:
    return (a + b - 1) // b * b


def _tpu_defaults():
    """(target_block_bytes, scoped_vmem_cap_bytes) for the local TPU generation."""
    kind = ""
    try:
        kind = jax.devices()[0].device_kind.lower()
    except Exception:
        pass

    vmem_phys = 64 * 1024 * 1024  # conservative default: v7x per-TC physical VMEM
    try:
        info = pltpu.get_tpu_info()
        vmem_phys = int(getattr(info, "vmem_capacity_bytes", vmem_phys)) or vmem_phys
    except Exception:
        pass

    # Leave >=25% of physical VMEM for Pallas internal scratch / semaphores.
    scoped_cap = (vmem_phys * 3) // 4

    # Block size scales with HBM bandwidth: bigger on v7x (~3.2 TB/s) where a
    # 2 MiB block would leave ~20% per-step overhead exposed; ~4 MiB is on the
    # measured roofline plateau for v5e/v6e.
    if ("v7" in kind) or ("tpu7" in kind):
        block_bytes = 8 * 1024 * 1024
    else:
        block_bytes = 4 * 1024 * 1024
    return block_bytes, scoped_cap


def swish(x: jax.Array, *, inplace: bool = False,
          target_block_bytes: int | None = None) -> jax.Array:
    """Elementwise swish: x * sigmoid(x). Any shape / float dtype.

    inplace=True mirrors nn.Swish(inplace=True) by aliasing the output onto the
    kernel's input buffer. Note this only avoids an extra HBM buffer if the
    caller actually donates x (e.g. jit donate_argnums); otherwise XLA inserts
    a copy silently.
    """
    orig_shape = x.shape
    dtype = x.dtype
    itemsize = jnp.dtype(dtype).itemsize
    n = x.size

    default_block_bytes, scoped_cap = _tpu_defaults()
    if target_block_bytes is None:
        target_block_bytes = default_block_bytes
    # Keep double-buffered in+out (4x block) plus slack inside the scoped cap.
    target_block_bytes = max(_LANES * _SUBLANE_MULT * itemsize,
                             min(target_block_bytes, scoped_cap // 5))

    x_flat = jnp.ravel(x)                 # contiguous input -> free reshape
    rows = n // _LANES
    tail = n - rows * _LANES
    n_main = rows * _LANES

    if rows == 0:
        # Fewer than one vector row: a kernel launch is pure overhead.
        return _swish_jnp(x_flat).reshape(orig_shape)

    x2d = x_flat[:n_main].reshape(rows, _LANES)   # free when tail == 0

    # Block rows: aim for ~target_block_bytes per block, sublane-tiling aligned.
    block_rows = max(_SUBLANE_MULT,
                     _round_up(target_block_bytes // (_LANES * itemsize),
                               _SUBLANE_MULT))
    if block_rows >= rows:
        block_rows = rows   # single block; full-extent block shape is always legal
    # Megacore load balance (v7x has 2 TCs/chip): give the "parallel" axis at
    # least 2 grid steps whenever there's enough data to split. Harmless on
    # single-TC chips (one extra ~0.35us step).
    if (pl.cdiv(rows, block_rows) < _MIN_GRID_STEPS
            and rows >= _MIN_GRID_STEPS * _SUBLANE_MULT):
        block_rows = _round_up(pl.cdiv(rows, _MIN_GRID_STEPS), _SUBLANE_MULT)

    grid = (pl.cdiv(rows, block_rows),)
    block_bytes = block_rows * _LANES * itemsize
    # 2x double-buffered input + 2x output + slack, capped below physical VMEM.
    vmem_limit = int(min(scoped_cap, max(32 * 1024 * 1024, 5 * block_bytes)))

    out2d = pl.pallas_call(
        _swish_kernel,
        out_shape=jax.ShapeDtypeStruct((rows, _LANES), dtype),
        grid_spec=pltpu.PrefetchScalarGridSpec(
            num_scalar_prefetch=0,
            grid=grid,
            in_specs=[pl.BlockSpec((block_rows, _LANES), lambda i: (i, 0))],
            out_specs=pl.BlockSpec((block_rows, _LANES), lambda i: (i, 0)),
        ),
        compiler_params=pltpu.CompilerParams(
            dimension_semantics=("parallel",),
            vmem_limit_bytes=vmem_limit,
        ),
        cost_estimate=pl.CostEstimate(
            flops=4 * n_main,             # ~4 VPU ops/elem for x * sigmoid(x)
            transcendentals=n_main,
            bytes_accessed=2 * n_main * itemsize),
        input_output_aliases=({0: 0} if (inplace and tail == 0) else {}),
    )(x2d)

    if tail == 0:
        return out2d.reshape(orig_shape)

    # Ragged tail (< 128 elements): trivial jnp swish, then stitch back.
    tail_out = _swish_jnp(x_flat[n_main:])
    return jnp.concatenate([out2d.reshape(-1), tail_out]).reshape(orig_shape)


if __name__ == "__main__":
    def ref(v):
        return v * jax.nn.sigmoid(v)

    # NCHW, as the PyTorch module would see it (module default: inplace=False).
    x = jax.random.normal(jax.random.PRNGKey(0), (2, 4, 16, 16), dtype=jnp.float32)
    y = swish(x)
    jax.block_until_ready(y)
    assert y.shape == x.shape and y.dtype == x.dtype
    assert jnp.allclose(y, ref(x), atol=1e-6, rtol=1e-6)

    # Element count not divisible by 128 -> ragged path (prefix kernel + jnp tail).
    x2 = jax.random.normal(jax.random.PRNGKey(1), (3, 5, 7, 9), dtype=jnp.float32)
    y2 = swish(x2)
    jax.block_until_ready(y2)
    assert jnp.allclose(y2, ref(x2), atol=1e-6, rtol=1e-6)

    # Larger input -> multi-block grid + megacore split path.
    x3 = jax.random.normal(jax.random.PRNGKey(2), (8, 32, 64, 64), dtype=jnp.float32)
    y3 = swish(x3)
    jax.block_until_ready(y3)
    assert jnp.allclose(y3, ref(x3), atol=1e-6, rtol=1e-6)

    # bf16 input (compute still in f32 inside the kernel).
    x4 = jax.random.normal(jax.random.PRNGKey(3), (2, 4, 16, 16), dtype=jnp.bfloat16)
    y4 = swish(x4)
    jax.block_until_ready(y4)
    assert y4.dtype == jnp.bfloat16
    assert jnp.allclose(y4.astype(jnp.float32), ref(x4.astype(jnp.float32)),
                        atol=2e-2, rtol=2e-2)

    print("KERNEL_OK")
</pallas_src>

<mosaic_0001>
module attributes {stable_mosaic.version = 11 : i64} {
  func.func @_swish_kernel(%arg0: i32, %arg1: memref<16x128xf32, #tpu.memory_space<vmem>>, %arg2: memref<16x128xf32, #tpu.memory_space<vmem>>) attributes {dimension_semantics = [#tpu.dimension_semantics<parallel>], iteration_bounds = array<i64: 1>, scalar_prefetch = 0 : i64, scratch_operands = 0 : i64, tpu.core_type = #tpu.core_type<tc>, window_params = [{transform_indices = @transform_0, window_bounds = array<i64: 16, 128>}, {transform_indices = @transform_1, window_bounds = array<i64: 16, 128>}]} {
    %c0 = arith.constant 0 : index
    %c0_0 = arith.constant 0 : index
    %0 = vector.load %arg1[%c0, %c0_0] : memref<16x128xf32, #tpu.memory_space<vmem>>, vector<16x128xf32>
    %1 = arith.negf %0 : vector<16x128xf32>
    %2 = math.exp %1 : vector<16x128xf32>
    %cst = arith.constant 1.000000e+00 : f32
    %3 = vector.broadcast %cst : f32 to vector<16x128xf32>
    %4 = arith.addf %3, %2 : vector<16x128xf32>
    %5 = arith.divf %3, %4 : vector<16x128xf32>
    %6 = arith.mulf %0, %5 : vector<16x128xf32>
    %c0_1 = arith.constant 0 : index
    %c0_2 = arith.constant 0 : index
    %7 = vector.load %arg2[%c0_1, %c0_2] : memref<16x128xf32, #tpu.memory_space<vmem>>, vector<16x128xf32>
    tpu.vector_store %arg2[%c0_1, %c0_2], %6 {strides = array<i32>} : memref<16x128xf32, #tpu.memory_space<vmem>>, vector<16x128xf32>,
    return
  }
  func.func @transform_0(%arg0: i32) -> (i32, i32) {
    %c0_i32 = arith.constant 0 : i32
    %c0_i32_0 = arith.constant 0 : i32
    return %arg0, %c0_i32 : i32, i32
  }
  func.func @transform_1(%arg0: i32) -> (i32, i32) {
    %c0_i32 = arith.constant 0 : i32
    %c0_i32_0 = arith.constant 0 : i32
    return %arg0, %c0_i32 : i32, i32
  }
}

</mosaic_0001>

<llo_original>
// kernel: tpu_custom_call.1
$region0: #{tpu_custom_call.1}
  #allocation0 [shape = 'u32[]', space=smem, size = 0x4, offset = 0x4, fixed_abs, tag = 'smem constant byte address 0x4 - core index']
  #allocation1 [shape = 'u32[144,128]{1,0:T(1,128)}', space=vmem, size = 0x12000, scoped, tag = 'internal scratch']
  %s0 = inlined_call_operand.hbm [shape: f32[16,128], index: 0, kind: input, shape index: {}]
  %s1 = inlined_call_operand.hbm [shape: f32[16,128], index: 1, kind: output, shape index: {}]
  %s2 = sld [smem:[#allocation0]]
  $region18: #{tpu_custom_call.1} parent=0
    _
  %s4 = ssub.s32 1, %s2
  %s5 = scalar_select 0, %s4, %s2
  $region1: #{tpu_custom_call.1} parent=0
    #allocation2 [shape = 'u8[8192]{0}', space=vmem, size = 0x2000, scoped, tag = 'input window, operand 0, single buffered']
    #allocation3 [shape = 's32[1]{0}', space=sflag, size = 0x4, scoped, tag = 'scoped memory for tpu_custom_call.1']
    #allocation4 [shape = 's32[1]{0}', space=sflag, size = 0x4, scoped, tag = 'scoped memory for tpu_custom_call.1']
    #allocation5 [shape = 'u8[8192]{0}', space=vmem, size = 0x2000, scoped, tag = 'output window, operand 0, single buffered']
    %6 = vsyncpa [#allocation3], 0
    %7 = vsyncpa [#allocation4], 0
    // Predicated region
    $region2: #{tpu_custom_call.1} parent=1 // pred_check
      _
    $region3: #{tpu_custom_call.1} parent=1 // pred_check_branch
      %9 = sbr.rel (0) target = $region5
    $region4: #{tpu_custom_call.1} parent=1 // pred_region
      %s11 = ssub.s32 256, 256
      %12 = vsyncadd [#allocation3], %s11
      %s13 = sshll.u32 [#allocation2], 4
      %s14 = int_to_ptr.vmem [resolvable:$true] %s13
      %19 = dma.hbm_to_vmem [thread:$0]  %s0, 256, %s14, [#allocation3], 128, 128, 8
    $region5: #{tpu_custom_call.1} parent=1 // pred_fallthru
      _
    // Predicated region
    $region6: #{tpu_custom_call.1} parent=1 // pred_check
      _
    $region7: #{tpu_custom_call.1} parent=1 // pred_check_branch
      %21 = sbr.rel (0) target = $region9
    $region8: #{tpu_custom_call.1} parent=1 // pred_region
      %22 = dma.done [#allocation3], 256
    $region9: #{tpu_custom_call.1} parent=1 // pred_fallthru
      _
    %v23 = vld [vmem:[#allocation2] sm:$0xff]
    %v24 = vld [vmem:[#allocation2 + $0x8] sm:$0xff]
    %v25 = vxor.u32 %v23, 2147483648
    %v26 = vxor.u32 %v24, 2147483648
    %v27 = vmul.f32 %v25, 1.442695
    %v28 = vpow.pop %v27
    %v29 = vmul.f32 %v26, 1.442695
    %v30 = vpow.pop %v29
    %v31 = vadd.f32 %v28, 1.0
    %v32 = vadd.f32 %v30, 1.0
    %v33 = vrcp.pop %v31
    %v34 = vmul.f32 1.0, %v33
    %v35 = vrcp.pop %v32
    %v36 = vmul.f32 1.0, %v35
    %v37 = vmul.f32 %v23, %v34
    %v38 = vmul.f32 %v24, %v36
    %39 = vst [vmem:[#allocation5] sm:$0xff] %v37
    %40 = vst [vmem:[#allocation5 + $0x8] sm:$0xff] %v38
    // Predicated region
    $region10: #{tpu_custom_call.1} parent=1 // pred_check
      _
    $region11: #{tpu_custom_call.1} parent=1 // pred_check_branch
      %42 = sbr.rel (0) target = $region13
    $region12: #{tpu_custom_call.1} parent=1 // pred_region
      %s44 = ssub.s32 256, 256
      %45 = vsyncadd [#allocation4], %s44
      %s46 = sshll.u32 [#allocation5], 4
      %s47 = int_to_ptr.vmem [resolvable:$true] %s46
      %52 = dma.vmem_to_hbm [thread:$0]  %s47, 256, %s1, [#allocation4], 128, 128, 8
    $region13: #{tpu_custom_call.1} parent=1 // pred_fallthru
      _
    // Predicated region
    $region14: #{tpu_custom_call.1} parent=1 // pred_check
      _
    $region15: #{tpu_custom_call.1} parent=1 // pred_check_branch
      %54 = sbr.rel (0) target = $region17
    $region16: #{tpu_custom_call.1} parent=1 // pred_region
      %55 = dma.done [#allocation4], 256
    $region17: #{tpu_custom_call.1} parent=1 // pred_fallthru
      _
    %56 = vsyncpa [#allocation3], 1
    %57 = vsyncpa [#allocation4], 1

</llo_original>
